<compile_context>
chip_gen: v7x
topology: tpu7x:2x2x1
jax: 0.10.0
libtpu: 0.0.40
codegen_flags: <defaults>
</compile_context>

<pallas_src>
import functools

import jax
import jax.numpy as jnp
from jax.experimental import pallas as pl
from jax.experimental.pallas import tpu as pltpu


def _round_up(x: int, m: int) -> int:
    return ((x + m - 1) // m) * m


def _swiglu_mlp_kernel(x_ref, w12_ref, w3_ref, o_ref, *, d_ffn_pad):
    w12 = w12_ref[...]                               # (d_embed, 2*d_ffn_pad)
    # Cast activations to the weight dtype: bf16 weights -> bf16 MXU inputs.
    x = x_ref[...].astype(w12.dtype)                 # (tm, d_embed)

    # Fused fc_1 / fc_2: one wide matmul, f32 accumulation.
    ab = jnp.dot(x, w12, preferred_element_type=jnp.float32)  # (tm, 2*d_ffn_pad)
    a = ab[:, :d_ffn_pad]                            # fc_1(h)
    b = ab[:, d_ffn_pad:]                            # fc_2(h)

    # silu(b) * a in f32 (sigmoid runs on the EUP slot; vmuls hide under MXU).
    gated = (b * jax.nn.sigmoid(b)) * a              # (tm, d_ffn_pad), f32

    # fc_3: cast gate product to the weight dtype (bf16 weights -> bf16 MXU).
    out = jnp.dot(gated.astype(w3_ref.dtype), w3_ref[...],
                  preferred_element_type=jnp.float32)
    o_ref[...] = out.astype(o_ref.dtype)


def prepare_mlp_weights(w1, w2, w3, dtype=None):
    """One-time weight fusion/padding.  Do NOT call per forward.

    w1, w2: (d_embed, d_ffn); w3: (d_ffn, d_embed).
    Returns (w12, w3p): fused (d_embed, 2*d_ffn_pad) and padded
    (d_ffn_pad, d_embed) weights with d_ffn zero-padded to a multiple of 128.
    Zero padding is numerically free: silu(0)*0 = 0 and the padded w3 rows are
    zero, so padded columns contribute nothing to the output.
    """
    d_embed, d_ffn = w1.shape
    assert w2.shape == (d_embed, d_ffn) and w3.shape == (d_ffn, d_embed)
    if dtype is not None:
        w1, w2, w3 = (w.astype(dtype) for w in (w1, w2, w3))
    d_ffn_pad = _round_up(d_ffn, 128)
    pad_f = d_ffn_pad - d_ffn
    w12 = jnp.concatenate(
        [jnp.pad(w1, ((0, 0), (0, pad_f))),
         jnp.pad(w2, ((0, 0), (0, pad_f)))], axis=1)
    w3p = jnp.pad(w3, ((0, pad_f), (0, 0)))
    return w12, w3p


@functools.partial(jax.jit, static_argnames=("tm",))
def swiglu_mlp(h, w12, w3p, *, tm=512):
    """h: (..., d_embed); w12/w3p from prepare_mlp_weights()."""
    orig_shape = h.shape
    d_embed = orig_shape[-1]
    d_ffn_pad = w12.shape[1] // 2
    assert w12.shape == (d_embed, 2 * d_ffn_pad)
    assert w3p.shape == (d_ffn_pad, d_embed)

    x = h.reshape(-1, d_embed)
    m = x.shape[0]

    x_item = jnp.dtype(h.dtype).itemsize
    w_item = jnp.dtype(w12.dtype).itemsize

    # Sublane packing for the token (second-to-last) dim of the x/out blocks.
    sub = max(8, 32 // x_item)
    # Cap the tile at ceil(m/2) so the parallel axis has >= 2 steps whenever
    # possible (v7x shards parallel grid axes across its 2 TensorCores).
    tm_cap = max(sub, _round_up(pl.cdiv(m, 2), sub))
    tm_eff = min(tm, tm_cap)
    grid = (pl.cdiv(m, tm_eff),)

    # Size-derived VMEM budget: single-buffered weights, double-buffered x/out,
    # f32 intermediates (ab + gated).  Never request v7x's whole 64 MiB.
    w_bytes = (w12.size + w3p.size) * w_item
    xo_bytes = 2 * tm_eff * d_embed * (x_item + x_item)
    interm_bytes = tm_eff * (3 * d_ffn_pad) * 4
    vmem_need = w_bytes + xo_bytes + interm_bytes
    vmem_limit = max(int(1.5 * vmem_need) + (4 << 20), 16 << 20)
    vmem_limit = min(vmem_limit, 48 << 20)            # ~75% of v7x's 64 MiB/TC
    vmem_limit = max(vmem_limit, int(1.1 * vmem_need))

    # Honest cost hint: per-operand itemsizes, weights counted exactly once.
    flops = 2 * m * d_embed * (2 * d_ffn_pad) + 2 * m * d_ffn_pad * d_embed
    bytes_accessed = (m * d_embed * x_item            # x in
                      + m * d_embed * x_item          # out
                      + (w12.size + w3p.size) * w_item)
    cost = pl.CostEstimate(flops=flops,
                           transcendentals=m * d_ffn_pad,
                           bytes_accessed=bytes_accessed)

    kernel = functools.partial(_swiglu_mlp_kernel, d_ffn_pad=d_ffn_pad)

    out = pl.pallas_call(
        kernel,
        out_shape=jax.ShapeDtypeStruct((m, d_embed), h.dtype),
        grid_spec=pl.GridSpec(
            grid=grid,
            in_specs=[
                pl.BlockSpec((tm_eff, d_embed), lambda i: (i, 0)),
                # Weights: constant index_map -> fetched once; single-buffered.
                pl.BlockSpec((d_embed, 2 * d_ffn_pad), lambda i: (0, 0),
                             pipeline_mode=pl.Buffered(1)),
                pl.BlockSpec((d_ffn_pad, d_embed), lambda i: (0, 0),
                             pipeline_mode=pl.Buffered(1)),
            ],
            out_specs=pl.BlockSpec((tm_eff, d_embed), lambda i: (i, 0)),
        ),
        compiler_params=pltpu.CompilerParams(
            dimension_semantics=("parallel",),
            vmem_limit_bytes=vmem_limit,
        ),
        cost_estimate=cost,
    )(x, w12, w3p)

    return out.reshape(orig_shape)


def init_mlp_params(key, d_embed, d_ffn, dtype=jnp.float32):
    """Synthetic weights shaped like the PyTorch module (Linear weight is
    (out, in)), transposed to (in, out) for the kernel."""
    k1, k2, k3 = jax.random.split(key, 3)
    scale1 = 1.0 / jnp.sqrt(d_embed)
    scale3 = 1.0 / jnp.sqrt(d_ffn)
    fc1_w = jax.random.uniform(k1, (d_ffn, d_embed), dtype, -scale1, scale1)
    fc2_w = jax.random.uniform(k2, (d_ffn, d_embed), dtype, -scale1, scale1)
    fc3_w = jax.random.uniform(k3, (d_embed, d_ffn), dtype, -scale3, scale3)
    return fc1_w.T, fc2_w.T, fc3_w.T


def reference_mlp(h, w1, w2, w3):
    a = h @ w1
    b = h @ w2
    return (jax.nn.silu(b) * a) @ w3


if __name__ == "__main__":
    d_embed = 32
    d_ffn = 680          # module default
    batch, seq = 2, 8

    key = jax.random.PRNGKey(0)
    k_x, k_w = jax.random.split(key)

    h = jax.random.normal(k_x, (batch, seq, d_embed), jnp.float32)
    w1, w2, w3 = init_mlp_params(k_w, d_embed, d_ffn)

    # One-time weight prep (hoisted out of the per-forward path).
    w12, w3p = prepare_mlp_weights(w1, w2, w3)

    out = jax.block_until_ready(swiglu_mlp(h, w12, w3p))
    ref = reference_mlp(h, w1, w2, w3)
    assert out.shape == (batch, seq, d_embed), out.shape
    assert jnp.allclose(out, ref, atol=1e-4, rtol=1e-4), \
        float(jnp.max(jnp.abs(out - ref)))

    # bf16-weight fast path (v6e/v7x MXU rate); f32 accumulation, looser tol.
    w12_bf, w3p_bf = prepare_mlp_weights(w1, w2, w3, dtype=jnp.bfloat16)
    out_bf = jax.block_until_ready(swiglu_mlp(h, w12_bf, w3p_bf))
    assert out_bf.shape == (batch, seq, d_embed), out_bf.shape
    assert jnp.allclose(out_bf, ref, atol=1e-1, rtol=1e-1), \
        float(jnp.max(jnp.abs(out_bf - ref)))

    print("KERNEL_OK")
</pallas_src>

<mosaic_0001>
module attributes {stable_mosaic.version = 11 : i64} {
  func.func @_swiglu_mlp_kernel(%arg0: i32, %arg1: memref<8x32xf32, #tpu.memory_space<vmem>>, %arg2: memref<32x1536xf32, #tpu.memory_space<vmem>>, %arg3: memref<768x32xf32, #tpu.memory_space<vmem>>, %arg4: memref<8x32xf32, #tpu.memory_space<vmem>>) attributes {dimension_semantics = [#tpu.dimension_semantics<parallel>], iteration_bounds = array<i64: 2>, scalar_prefetch = 0 : i64, scratch_operands = 0 : i64, tpu.core_type = #tpu.core_type<tc>, window_params = [{transform_indices = @transform_0, window_bounds = array<i64: 8, 32>}, {pipeline_mode = #tpu.pipeline_mode<synchronous>, transform_indices = @transform_1, window_bounds = array<i64: 32, 1536>}, {pipeline_mode = #tpu.pipeline_mode<synchronous>, transform_indices = @transform_2, window_bounds = array<i64: 768, 32>}, {transform_indices = @transform_3, window_bounds = array<i64: 8, 32>}]} {
    %c0 = arith.constant 0 : index
    %c0_0 = arith.constant 0 : index
    %0 = vector.load %arg2[%c0, %c0_0] : memref<32x1536xf32, #tpu.memory_space<vmem>>, vector<32x1536xf32>
    %c0_1 = arith.constant 0 : index
    %c0_2 = arith.constant 0 : index
    %1 = vector.load %arg1[%c0_1, %c0_2] : memref<8x32xf32, #tpu.memory_space<vmem>>, vector<8x32xf32>
    %cst = arith.constant dense<0.000000e+00> : vector<8x1536xf32>
    %2 = tpu.matmul %1, %0, %cst {dimension_numbers = #tpu.dot_dimension_numbers<[1], [0], [0], [1], [0, 0, 1, 1], [], []>} : vector<8x32xf32>, vector<32x1536xf32>, vector<8x1536xf32> -> vector<8x1536xf32>
    %3 = vector.extract_strided_slice %2 {offsets = [0, 0], sizes = [8, 768], strides = [1, 1]} : vector<8x1536xf32> to vector<8x768xf32>
    %4 = vector.extract_strided_slice %2 {offsets = [0, 768], sizes = [8, 768], strides = [1, 1]} : vector<8x1536xf32> to vector<8x768xf32>
    %5 = arith.negf %4 : vector<8x768xf32>
    %6 = math.exp %5 : vector<8x768xf32>
    %cst_3 = arith.constant 1.000000e+00 : f32
    %7 = vector.broadcast %cst_3 : f32 to vector<8x768xf32>
    %8 = arith.addf %7, %6 : vector<8x768xf32>
    %9 = arith.divf %7, %8 : vector<8x768xf32>
    %10 = arith.mulf %4, %9 : vector<8x768xf32>
    %11 = arith.mulf %10, %3 : vector<8x768xf32>
    %c0_4 = arith.constant 0 : index
    %c0_5 = arith.constant 0 : index
    %12 = vector.load %arg3[%c0_4, %c0_5] : memref<768x32xf32, #tpu.memory_space<vmem>>, vector<768x32xf32>
    %cst_6 = arith.constant dense<0.000000e+00> : vector<8x32xf32>
    %13 = tpu.matmul %11, %12, %cst_6 {dimension_numbers = #tpu.dot_dimension_numbers<[1], [0], [0], [1], [0, 0, 1, 1], [], []>} : vector<8x768xf32>, vector<768x32xf32>, vector<8x32xf32> -> vector<8x32xf32>
    %c0_7 = arith.constant 0 : index
    %c0_8 = arith.constant 0 : index
    %14 = vector.load %arg4[%c0_7, %c0_8] : memref<8x32xf32, #tpu.memory_space<vmem>>, vector<8x32xf32>
    tpu.vector_store %arg4[%c0_7, %c0_8], %13 {strides = array<i32>} : memref<8x32xf32, #tpu.memory_space<vmem>>, vector<8x32xf32>,
    return
  }
  func.func @transform_0(%arg0: i32) -> (i32, i32) {
    %c0_i32 = arith.constant 0 : i32
    %c0_i32_0 = arith.constant 0 : i32
    return %arg0, %c0_i32 : i32, i32
  }
  func.func @transform_1(%arg0: i32) -> (i32, i32) {
    %c0_i32 = arith.constant 0 : i32
    %c0_i32_0 = arith.constant 0 : i32
    %c0_i32_1 = arith.constant 0 : i32
    return %c0_i32, %c0_i32_0 : i32, i32
  }
  func.func @transform_2(%arg0: i32) -> (i32, i32) {
    %c0_i32 = arith.constant 0 : i32
    %c0_i32_0 = arith.constant 0 : i32
    %c0_i32_1 = arith.constant 0 : i32
    return %c0_i32, %c0_i32_0 : i32, i32
  }
  func.func @transform_3(%arg0: i32) -> (i32, i32) {
    %c0_i32 = arith.constant 0 : i32
    %c0_i32_0 = arith.constant 0 : i32
    return %arg0, %c0_i32 : i32, i32
  }
}

</mosaic_0001>

<llo_original>
// kernel: swiglu_mlp.1
$region0: #{swiglu_mlp.1}
  #allocation0 [shape = 'u32[]', space=smem, size = 0x4, offset = 0x4, fixed_abs, tag = 'smem constant byte address 0x4 - core index']
  #allocation1 [shape = 'u32[144,128]{1,0:T(1,128)}', space=vmem, size = 0x12000, scoped, tag = 'internal scratch']
  %s0 = inlined_call_operand.vmem [shape: f32[16,32], index: 0, kind: input, shape index: {}]
  %s1 = inlined_call_operand.vmem [shape: f32[32,1536], index: 1, kind: input, shape index: {}]
  %s2 = inlined_call_operand.vmem [shape: f32[768,32], index: 2, kind: input, shape index: {}]
  %s3 = inlined_call_operand.hbm [shape: f32[16,32], index: 3, kind: output, shape index: {}]
  %s4 = sld [smem:[#allocation0]]
  $region45: #{swiglu_mlp.1} parent=0
    _
  %s6 = ssub.s32 1, %s4
  %s7 = scalar_select 0, %s6, %s4
  $region1: #{swiglu_mlp.1} parent=0
    #allocation2 [shape = 'u8[8192]{0}', space=vmem, size = 0x2000, scoped, tag = 'output window, operand 0']
    #allocation3 [shape = 's32[2]{0}', space=sflag, size = 0x8, scoped, tag = 'scoped memory for swiglu_mlp.1']
    %8 = vsyncpa [#allocation3], 0
    %s9 = scalar_lea.sflag [#allocation3], 1
    %10 = vsyncpa %s9, 0
    loop: start=0, step=1, limit=4
    $region2: #{swiglu_mlp.1} parent=1 // loop_pre_header
      _
    $region3: #{swiglu_mlp.1} parent=1 // loop_header
      %s12 = sphi 0, %s16
      %p13 = scmp.ge.s32.totalorder %s12, 4
      %s22 = sphi 0, %s24
      %s25 = sphi 0, %s22
      %s26 = sphi 0, %s25
      %s42 = sphi 0, %s26
      %s46 = sphi 0, %s46
      %s48 = sphi 0, %s46
      %s49 = sphi 0, %s48
      %s63 = sphi 0, %s49
      %s67 = sphi 0, %s67
      %s69 = sphi 0, %s67
      %s70 = sphi 0, %s69
      %s84 = sphi 0, %s70
      %s90 = sphi 0, %s92
      %s93 = sphi 0, %s90
      %s94 = sphi 0, %s93
      %s110 = sphi 0, %s94
    $region4: #{swiglu_mlp.1} parent=1 // loop_header_branch
      %15 = sbr.rel (%p13) target = $region8
    $region5: #{swiglu_mlp.1} parent=1 // loop_body
      %s17 = ssub.s32 %s12, 1
      %s18 = ssub.s32 %s12, 2
      %s19 = sadd.s32 %s12, 1
      %s20 = ssub.s32 %s12, %s19
      %p21 = scmp.eq.s32.totalorder %s20, 0
      %s23 = sadd.s32 %s22, 1
      %s24 = scalar_select %p21, %s22, %s23
      %p27 = pneg %p21
      %p28 = scmp.eq.s32.totalorder %s12, 1
      %p29 = por %p27, %p28
      %p30 = scmp.ne.s32.totalorder %s22, %s25
      %p31 = scmp.eq.s32.totalorder %s12, 0
      %p32 = por %p30, %p31
      %p33 = scmp.ne.s32.totalorder %s22, %s25
      %p34 = scmp.eq.s32.totalorder %s17, 1
      %p35 = por %p33, %p34
      %p36 = scmp.ne.s32.totalorder %s25, %s26
      %p37 = scmp.eq.s32.totalorder %s17, 0
      %p38 = por %p36, %p37
      %p39 = scmp.ne.s32.totalorder %s25, %s26
      %p40 = scmp.eq.s32.totalorder %s18, 1
      %p41 = por %p39, %p40
      %p43 = scmp.ne.s32.totalorder %s26, %s42
      %p44 = scmp.eq.s32.totalorder %s18, 0
      %p45 = por %p43, %p44
      %s47 = sadd.s32 %s46, 1
      %p50 = scmp.eq.s32.totalorder %s12, 1
      %p51 = scmp.ne.s32.totalorder %s46, %s48
      %p52 = scmp.eq.s32.totalorder %s12, 0
      %p53 = por %p51, %p52
      %p54 = scmp.ne.s32.totalorder %s46, %s48
      %p55 = scmp.eq.s32.totalorder %s17, 1
      %p56 = por %p54, %p55
      %p57 = scmp.ne.s32.totalorder %s48, %s49
      %p58 = scmp.eq.s32.totalorder %s17, 0
      %p59 = por %p57, %p58
      %p60 = scmp.ne.s32.totalorder %s48, %s49
      %p61 = scmp.eq.s32.totalorder %s18, 1
      %p62 = por %p60, %p61
      %p64 = scmp.ne.s32.totalorder %s49, %s63
      %p65 = scmp.eq.s32.totalorder %s18, 0
      %p66 = por %p64, %p65
      %s68 = sadd.s32 %s67, 1
      %p71 = scmp.eq.s32.totalorder %s12, 1
      %p72 = scmp.ne.s32.totalorder %s67, %s69
      %p73 = scmp.eq.s32.totalorder %s12, 0
      %p74 = por %p72, %p73
      %p75 = scmp.ne.s32.totalorder %s67, %s69
      %p76 = scmp.eq.s32.totalorder %s17, 1
      %p77 = por %p75, %p76
      %p78 = scmp.ne.s32.totalorder %s69, %s70
      %p79 = scmp.eq.s32.totalorder %s17, 0
      %p80 = por %p78, %p79
      %p81 = scmp.ne.s32.totalorder %s69, %s70
      %p82 = scmp.eq.s32.totalorder %s18, 1
      %p83 = por %p81, %p82
      %p85 = scmp.ne.s32.totalorder %s70, %s84
      %p86 = scmp.eq.s32.totalorder %s18, 0
      %p87 = por %p85, %p86
      %s88 = ssub.s32 %s12, %s19
      %p89 = scmp.eq.s32.totalorder %s88, 0
      %s91 = sadd.s32 %s90, 1
      %s92 = scalar_select %p89, %s90, %s91
      %p95 = pneg %p89
      %p96 = scmp.eq.s32.totalorder %s12, 1
      %p97 = por %p95, %p96
      %p98 = scmp.ne.s32.totalorder %s90, %s93
      %p99 = scmp.eq.s32.totalorder %s12, 0
      %p100 = por %p98, %p99
      %p101 = scmp.ne.s32.totalorder %s90, %s93
      %p102 = scmp.eq.s32.totalorder %s17, 1
      %p103 = por %p101, %p102
      %p104 = scmp.ne.s32.totalorder %s93, %s94
      %p105 = scmp.eq.s32.totalorder %s17, 0
      %p106 = por %p104, %p105
      %p107 = scmp.ne.s32.totalorder %s93, %s94
      %p108 = scmp.eq.s32.totalorder %s18, 1
      %p109 = por %p107, %p108
      %p111 = scmp.ne.s32.totalorder %s94, %s110
      %p112 = scmp.eq.s32.totalorder %s18, 0
      %p113 = por %p111, %p112
      %p114 = scmp.le.s32.totalorder 1, %s12
      %p115 = scmp.lt.s32.totalorder %s12, 3
      %p116 = pnand %p114, %p115
      %p117 = pneg %p116
      // Predicated region
      $region9: #{swiglu_mlp.1} parent=5 // pred_check
        _
      $region10: #{swiglu_mlp.1} parent=5 // pred_check_branch
        %119 = sbr.rel (%p116) target = $region12
      $region11: #{swiglu_mlp.1} parent=5 // pred_region
        %s120 = ssub.s32 %s12, 1
        // Predicated region
        $region13: #{swiglu_mlp.1} parent=11 // pred_check
          %p121 = pneg %p59
        $region14: #{swiglu_mlp.1} parent=11 // pred_check_branch
          %123 = sbr.rel (%p121) target = $region16
        $region15: #{swiglu_mlp.1} parent=11 // pred_region
          _
        $region16: #{swiglu_mlp.1} parent=11 // pred_fallthru
          _
        // Predicated region
        $region17: #{swiglu_mlp.1} parent=11 // pred_check
          %p124 = pneg %p80
        $region18: #{swiglu_mlp.1} parent=11 // pred_check_branch
          %126 = sbr.rel (%p124) target = $region20
        $region19: #{swiglu_mlp.1} parent=11 // pred_region
          _
        $region20: #{swiglu_mlp.1} parent=11 // pred_fallthru
          _
      $region12: #{swiglu_mlp.1} parent=5 // pred_fallthru
        _
      %p127 = scmp.lt.s32.totalorder %s12, 2
      // Predicated region
      $region21: #{swiglu_mlp.1} parent=5 // pred_check
        %p128 = pneg %p127
      $region22: #{swiglu_mlp.1} parent=5 // pred_check_branch
        %130 = sbr.rel (%p128) target = $region24
      $region23: #{swiglu_mlp.1} parent=5 // pred_region
        // Predicated region
        $region25: #{swiglu_mlp.1} parent=23 // pred_check
          %p131 = pneg %p32
        $region26: #{swiglu_mlp.1} parent=23 // pred_check_branch
          %133 = sbr.rel (%p131) target = $region28
        $region27: #{swiglu_mlp.1} parent=23 // pred_region
          %p134 = scmp.lt.s32.totalorder %s12, 1
          %s135 = scalar_select %p134, %s12, 1
          %s136 = smul.addr %s135, 8
          %s137 = scalar_lea.vmem %s0, %s136
        $region28: #{swiglu_mlp.1} parent=23 // pred_fallthru
          _
      $region24: #{swiglu_mlp.1} parent=5 // pred_fallthru
        _
      %p138 = scmp.le.s32.totalorder 1, %s12
      %p139 = scmp.lt.s32.totalorder %s12, 3
      %p140 = pnand %p138, %p139
      %p141 = pneg %p140
      // Predicated region
      $region29: #{swiglu_mlp.1} parent=5 // pred_check
        _
      $region30: #{swiglu_mlp.1} parent=5 // pred_check_branch
        %143 = sbr.rel (%p140) target = $region32
      $region31: #{swiglu_mlp.1} parent=5 // pred_region
        %s144 = ssub.s32 %s12, 1
        %p145 = scmp.lt.s32.totalorder %s17, 1
        %s146 = scalar_select %p145, %s17, 1
        %s147 = smul.addr %s146, 8
        %s148 = scalar_lea.vmem %s0, %s147
        %p149 = pneg %p38
        %p150 = pneg %p35
        %p151 = pneg %p59
        %p152 = pneg %p56
        %p153 = pneg %p80
        %p154 = pneg %p77
        %p155 = pneg %p106
        %p156 = pneg %p103
        %s157 = sand.u32 %s93, 1
        %s158 = scalar_lea.sflag [#allocation3], %s157
        %s159 = sand.u32 %s93, 1
        %s160 = smul.addr %s159, 8
        %s161 = scalar_lea.vmem [#allocation2], %s160
        %p162 = scmp.lt.s32.totalorder %s17, 1
        %s163 = scalar_select %p162, %s17, 1
        %s164 = smul.addr %s163, 8
        %s165 = scalar_lea.vmem %s0, %s164
        %v166 = vld [vmem:[%s1] sm:$0xff]
        %v167 = vld [vmem:[%s1 + $0x8] sm:$0xff]
        %v168 = vld [vmem:[%s1 + $0x10] sm:$0xff]
        %v169 = vld [vmem:[%s1 + $0x18] sm:$0xff]
        %v170 = vld [vmem:[%s1 + $0x20] sm:$0xff]
        %v171 = vld [vmem:[%s1 + $0x28] sm:$0xff]
        %v172 = vld [vmem:[%s1 + $0x30] sm:$0xff]
        %v173 = vld [vmem:[%s1 + $0x38] sm:$0xff]
        %v174 = vld [vmem:[%s1 + $0x40] sm:$0xff]
        %v175 = vld [vmem:[%s1 + $0x48] sm:$0xff]
        %v176 = vld [vmem:[%s1 + $0x50] sm:$0xff]
        %v177 = vld [vmem:[%s1 + $0x58] sm:$0xff]
        %v178 = vld [vmem:[%s1 + $0x60] sm:$0xff]
        %v179 = vld [vmem:[%s1 + $0x68] sm:$0xff]
        %v180 = vld [vmem:[%s1 + $0x70] sm:$0xff]
        %v181 = vld [vmem:[%s1 + $0x78] sm:$0xff]
        %v182 = vld [vmem:[%s1 + $0x80] sm:$0xff]
        %v183 = vld [vmem:[%s1 + $0x88] sm:$0xff]
        %v184 = vld [vmem:[%s1 + $0x90] sm:$0xff]
        %v185 = vld [vmem:[%s1 + $0x98] sm:$0xff]
        %v186 = vld [vmem:[%s1 + $0xa0] sm:$0xff]
        %v187 = vld [vmem:[%s1 + $0xa8] sm:$0xff]
        %v188 = vld [vmem:[%s1 + $0xb0] sm:$0xff]
        %v189 = vld [vmem:[%s1 + $0xb8] sm:$0xff]
        %v190 = vld [vmem:[%s1 + $0xc0] sm:$0xff]
        %v191 = vld [vmem:[%s1 + $0xc8] sm:$0xff]
        %v192 = vld [vmem:[%s1 + $0xd0] sm:$0xff]
        %v193 = vld [vmem:[%s1 + $0xd8] sm:$0xff]
        %v194 = vld [vmem:[%s1 + $0xe0] sm:$0xff]
        %v195 = vld [vmem:[%s1 + $0xe8] sm:$0xff]
        %v196 = vld [vmem:[%s1 + $0xf0] sm:$0xff]
        %v197 = vld [vmem:[%s1 + $0xf8] sm:$0xff]
        %v198 = vld [vmem:[%s1 + $0x100] sm:$0xff]
        %v199 = vld [vmem:[%s1 + $0x108] sm:$0xff]
        %v200 = vld [vmem:[%s1 + $0x110] sm:$0xff]
        %v201 = vld [vmem:[%s1 + $0x118] sm:$0xff]
        %v202 = vld [vmem:[%s1 + $0x120] sm:$0xff]
        %v203 = vld [vmem:[%s1 + $0x128] sm:$0xff]
        %v204 = vld [vmem:[%s1 + $0x130] sm:$0xff]
        %v205 = vld [vmem:[%s1 + $0x138] sm:$0xff]
        %v206 = vld [vmem:[%s1 + $0x140] sm:$0xff]
        %v207 = vld [vmem:[%s1 + $0x148] sm:$0xff]
        %v208 = vld [vmem:[%s1 + $0x150] sm:$0xff]
        %v209 = vld [vmem:[%s1 + $0x158] sm:$0xff]
        %v210 = vld [vmem:[%s1 + $0x160] sm:$0xff]
        %v211 = vld [vmem:[%s1 + $0x168] sm:$0xff]
        %v212 = vld [vmem:[%s1 + $0x170] sm:$0xff]
        %v213 = vld [vmem:[%s1 + $0x178] sm:$0xff]
        %v214 = vld [vmem:[%s165] sm:$0xff]
        %vm215 = vcmask 261120
        %v217 = vsel %vm215, %v214, 0
        %219 = vmatprep.subr.mxu0 %v167
        %220 = vmatpush1.msra.mxu0 %v166
        %221 = vmatprep.subr.mxu0 %v179
        %222 = vmatpush1.msra.mxu0 %v178
        %223 = vmatprep.subr.mxu0 %v191
        %224 = vmatpush1.msra.mxu0 %v190
        %225 = vmatprep.subr.mxu0 %v203
        %226 = vmatpush1.msra.mxu0 %v202
        %227 = vmatprep.subr.mxu0 0.0
        %228 = vmatpush1.msra.mxu0 0.0
        %229 = vmatprep.subr.mxu0 0.0
        %230 = vmatpush1.msra.mxu0 0.0
        %231 = vmatprep.subr.mxu0 0.0
        %232 = vmatpush1.msra.mxu0 0.0
        %233 = vmatprep.subr.mxu0 0.0
        %234 = vmatpush1.msra.mxu0 0.0
        %235 = vmatprep.subr.mxu0 0.0
        %236 = vmatpush1.msra.mxu0 0.0
        %237 = vmatprep.subr.mxu0 0.0
        %238 = vmatpush1.msra.mxu0 0.0
        %239 = vmatprep.subr.mxu0 0.0
        %240 = vmatpush1.msra.mxu0 0.0
        %241 = vmatprep.subr.mxu0 0.0
        %242 = vmatpush1.msra.mxu0 0.0
        %243 = vmatprep.subr.mxu0 0.0
        %244 = vmatpush1.msra.mxu0 0.0
        %245 = vmatprep.subr.mxu0 0.0
        %246 = vmatpush1.msra.mxu0 0.0
        %247 = vmatprep.subr.mxu0 0.0
        %248 = vmatpush1.msra.mxu0 0.0
        %249 = vmatprep.subr.mxu0 0.0
        %250 = vmatpush1.msra.mxu0 0.0
        %251 = vmatprep.subr.mxu0 0.0
        %252 = vmatpush1.msra.mxu0 0.0
        %253 = vmatprep.subr.mxu0 0.0
        %254 = vmatpush1.msra.mxu0 0.0
        %255 = vmatprep.subr.mxu0 0.0
        %256 = vmatpush1.msra.mxu0 0.0
        %257 = vmatprep.subr.mxu0 0.0
        %258 = vmatpush1.msra.mxu0 0.0
        %259 = vmatprep.subr.mxu0 0.0
        %260 = vmatpush1.msra.mxu0 0.0
        %261 = vmatprep.subr.mxu0 0.0
        %262 = vmatpush1.msra.mxu0 0.0
        %263 = vmatprep.subr.mxu0 0.0
        %264 = vmatpush1.msra.mxu0 0.0
        %265 = vmatprep.subr.mxu0 0.0
        %266 = vmatpush1.msra.mxu0 0.0
        %267 = vmatprep.subr.mxu0 0.0
        %268 = vmatpush1.msra.mxu0 0.0
        %269 = vmatprep.subr.mxu0 0.0
        %270 = vmatpush1.msra.mxu0 0.0
        %271 = vmatprep.subr.mxu0 0.0
        %272 = vmatpush1.msra.mxu0 0.0
        %273 = vmatprep.subr.mxu0 0.0
        %274 = vmatpush1.msra.mxu0 0.0
        %275 = vmatprep.subr.mxu0 0.0
        %276 = vmatpush1.msra.mxu0 0.0
        %277 = vmatprep.subr.mxu0 0.0
        %278 = vmatpush1.msra.mxu0 0.0
        %279 = vmatprep.subr.mxu0 0.0
        %280 = vmatpush1.msra.mxu0 0.0
        %281 = vmatprep.subr.mxu0 0.0
        %282 = vmatpush1.msra.mxu0 0.0
        %283 = vmatprep.mubr.f32.mxu0 0.0
        %284 = vmatmul.mubr.f32.gmra.mrb[0].mxu0 %v217
        %v285 = vpop.f32.mrb[0].mxu0
        %v286 = vadd.f32 0.0, %v285
        %v287 = vpop.f32.mrb[0].mxu0
        %v288 = vadd.f32 0.0, %v287
        %289 = vdwg.mxu0
        %290 = vmatprep.subr.mxu0 %v169
        %291 = vmatpush1.msra.mxu0 %v168
        %292 = vmatprep.subr.mxu0 %v181
        %293 = vmatpush1.msra.mxu0 %v180
        %294 = vmatprep.subr.mxu0 %v193
        %295 = vmatpush1.msra.mxu0 %v192
        %296 = vmatprep.subr.mxu0 %v205
        %297 = vmatpush1.msra.mxu0 %v204
        %298 = vmatprep.subr.mxu0 0.0
        %299 = vmatpush1.msra.mxu0 0.0
        %300 = vmatprep.subr.mxu0 0.0
        %301 = vmatpush1.msra.mxu0 0.0
        %302 = vmatprep.subr.mxu0 0.0
        %303 = vmatpush1.msra.mxu0 0.0
        %304 = vmatprep.subr.mxu0 0.0
        %305 = vmatpush1.msra.mxu0 0.0
        %306 = vmatprep.subr.mxu0 0.0
        %307 = vmatpush1.msra.mxu0 0.0
        %308 = vmatprep.subr.mxu0 0.0
        %309 = vmatpush1.msra.mxu0 0.0
        %310 = vmatprep.subr.mxu0 0.0
        %311 = vmatpush1.msra.mxu0 0.0
        %312 = vmatprep.subr.mxu0 0.0
        %313 = vmatpush1.msra.mxu0 0.0
        %314 = vmatprep.subr.mxu0 0.0
        %315 = vmatpush1.msra.mxu0 0.0
        %316 = vmatprep.subr.mxu0 0.0
        %317 = vmatpush1.msra.mxu0 0.0
        %318 = vmatprep.subr.mxu0 0.0
        %319 = vmatpush1.msra.mxu0 0.0
        %320 = vmatprep.subr.mxu0 0.0
        %321 = vmatpush1.msra.mxu0 0.0
        %322 = vmatprep.subr.mxu0 0.0
        %323 = vmatpush1.msra.mxu0 0.0
        %324 = vmatprep.subr.mxu0 0.0
        %325 = vmatpush1.msra.mxu0 0.0
        %326 = vmatprep.subr.mxu0 0.0
        %327 = vmatpush1.msra.mxu0 0.0
        %328 = vmatprep.subr.mxu0 0.0
        %329 = vmatpush1.msra.mxu0 0.0
        %330 = vmatprep.subr.mxu0 0.0
        %331 = vmatpush1.msra.mxu0 0.0
        %332 = vmatprep.subr.mxu0 0.0
        %333 = vmatpush1.msra.mxu0 0.0
        %334 = vmatprep.subr.mxu0 0.0
        %335 = vmatpush1.msra.mxu0 0.0
        %336 = vmatprep.subr.mxu0 0.0
        %337 = vmatpush1.msra.mxu0 0.0
        %338 = vmatprep.subr.mxu0 0.0
        %339 = vmatpush1.msra.mxu0 0.0
        %340 = vmatprep.subr.mxu0 0.0
        %341 = vmatpush1.msra.mxu0 0.0
        %342 = vmatprep.subr.mxu0 0.0
        %343 = vmatpush1.msra.mxu0 0.0
        %344 = vmatprep.subr.mxu0 0.0
        %345 = vmatpush1.msra.mxu0 0.0
        %346 = vmatprep.subr.mxu0 0.0
        %347 = vmatpush1.msra.mxu0 0.0
        %348 = vmatprep.subr.mxu0 0.0
        %349 = vmatpush1.msra.mxu0 0.0
        %350 = vmatprep.subr.mxu0 0.0
        %351 = vmatpush1.msra.mxu0 0.0
        %352 = vmatprep.subr.mxu0 0.0
        %353 = vmatpush1.msra.mxu0 0.0
        %354 = vmatprep.mubr.f32.mxu0 0.0
        %355 = vmatmul.mubr.f32.gmra.mrb[0].mxu0 %v217
        %v356 = vpop.f32.mrb[0].mxu0
        %v357 = vadd.f32 0.0, %v356
        %v358 = vpop.f32.mrb[0].mxu0
        %v359 = vadd.f32 0.0, %v358
        %360 = vdwg.mxu0
        %361 = vmatprep.subr.mxu0 %v171
        %362 = vmatpush1.msra.mxu0 %v170
        %363 = vmatprep.subr.mxu0 %v183
        %364 = vmatpush1.msra.mxu0 %v182
        %365 = vmatprep.subr.mxu0 %v195
        %366 = vmatpush1.msra.mxu0 %v194
        %367 = vmatprep.subr.mxu0 %v207
        %368 = vmatpush1.msra.mxu0 %v206
        %369 = vmatprep.subr.mxu0 0.0
        %370 = vmatpush1.msra.mxu0 0.0
        %371 = vmatprep.subr.mxu0 0.0
        %372 = vmatpush1.msra.mxu0 0.0
        %373 = vmatprep.subr.mxu0 0.0
        %374 = vmatpush1.msra.mxu0 0.0
        %375 = vmatprep.subr.mxu0 0.0
        %376 = vmatpush1.msra.mxu0 0.0
        %377 = vmatprep.subr.mxu0 0.0
        %378 = vmatpush1.msra.mxu0 0.0
        %379 = vmatprep.subr.mxu0 0.0
        %380 = vmatpush1.msra.mxu0 0.0
        %381 = vmatprep.subr.mxu0 0.0
        %382 = vmatpush1.msra.mxu0 0.0
        %383 = vmatprep.subr.mxu0 0.0
        %384 = vmatpush1.msra.mxu0 0.0
        %385 = vmatprep.subr.mxu0 0.0
        %386 = vmatpush1.msra.mxu0 0.0
        %387 = vmatprep.subr.mxu0 0.0
        %388 = vmatpush1.msra.mxu0 0.0
        %389 = vmatprep.subr.mxu0 0.0
        %390 = vmatpush1.msra.mxu0 0.0
        %391 = vmatprep.subr.mxu0 0.0
        %392 = vmatpush1.msra.mxu0 0.0
        %393 = vmatprep.subr.mxu0 0.0
        %394 = vmatpush1.msra.mxu0 0.0
        %395 = vmatprep.subr.mxu0 0.0
        %396 = vmatpush1.msra.mxu0 0.0
        %397 = vmatprep.subr.mxu0 0.0
        %398 = vmatpush1.msra.mxu0 0.0
        %399 = vmatprep.subr.mxu0 0.0
        %400 = vmatpush1.msra.mxu0 0.0
        %401 = vmatprep.subr.mxu0 0.0
        %402 = vmatpush1.msra.mxu0 0.0
        %403 = vmatprep.subr.mxu0 0.0
        %404 = vmatpush1.msra.mxu0 0.0
        %405 = vmatprep.subr.mxu0 0.0
        %406 = vmatpush1.msra.mxu0 0.0
        %407 = vmatprep.subr.mxu0 0.0
        %408 = vmatpush1.msra.mxu0 0.0
        %409 = vmatprep.subr.mxu0 0.0
        %410 = vmatpush1.msra.mxu0 0.0
        %411 = vmatprep.subr.mxu0 0.0
        %412 = vmatpush1.msra.mxu0 0.0
        %413 = vmatprep.subr.mxu0 0.0
        %414 = vmatpush1.msra.mxu0 0.0
        %415 = vmatprep.subr.mxu0 0.0
        %416 = vmatpush1.msra.mxu0 0.0
        %417 = vmatprep.subr.mxu0 0.0
        %418 = vmatpush1.msra.mxu0 0.0
        %419 = vmatprep.subr.mxu0 0.0
        %420 = vmatpush1.msra.mxu0 0.0
        %421 = vmatprep.subr.mxu0 0.0
        %422 = vmatpush1.msra.mxu0 0.0
        %423 = vmatprep.subr.mxu0 0.0
        %424 = vmatpush1.msra.mxu0 0.0
        %425 = vmatprep.mubr.f32.mxu0 0.0
        %426 = vmatmul.mubr.f32.gmra.mrb[0].mxu0 %v217
        %v427 = vpop.f32.mrb[0].mxu0
        %v428 = vadd.f32 0.0, %v427
        %v429 = vpop.f32.mrb[0].mxu0
        %v430 = vadd.f32 0.0, %v429
        %431 = vdwg.mxu0
        %432 = vmatprep.subr.mxu0 %v173
        %433 = vmatpush1.msra.mxu0 %v172
        %434 = vmatprep.subr.mxu0 %v185
        %435 = vmatpush1.msra.mxu0 %v184
        %436 = vmatprep.subr.mxu0 %v197
        %437 = vmatpush1.msra.mxu0 %v196
        %438 = vmatprep.subr.mxu0 %v209
        %439 = vmatpush1.msra.mxu0 %v208
        %440 = vmatprep.subr.mxu0 0.0
        %441 = vmatpush1.msra.mxu0 0.0
        %442 = vmatprep.subr.mxu0 0.0
        %443 = vmatpush1.msra.mxu0 0.0
        %444 = vmatprep.subr.mxu0 0.0
        %445 = vmatpush1.msra.mxu0 0.0
        %446 = vmatprep.subr.mxu0 0.0
        %447 = vmatpush1.msra.mxu0 0.0
        %448 = vmatprep.subr.mxu0 0.0
        %449 = vmatpush1.msra.mxu0 0.0
        %450 = vmatprep.subr.mxu0 0.0
        %451 = vmatpush1.msra.mxu0 0.0
        %452 = vmatprep.subr.mxu0 0.0
        %453 = vmatpush1.msra.mxu0 0.0
        %454 = vmatprep.subr.mxu0 0.0
        %455 = vmatpush1.msra.mxu0 0.0
        %456 = vmatprep.subr.mxu0 0.0
        %457 = vmatpush1.msra.mxu0 0.0
        %458 = vmatprep.subr.mxu0 0.0
        %459 = vmatpush1.msra.mxu0 0.0
        %460 = vmatprep.subr.mxu0 0.0
        %461 = vmatpush1.msra.mxu0 0.0
        %462 = vmatprep.subr.mxu0 0.0
        %463 = vmatpush1.msra.mxu0 0.0
        %464 = vmatprep.subr.mxu0 0.0
        %465 = vmatpush1.msra.mxu0 0.0
        %466 = vmatprep.subr.mxu0 0.0
        %467 = vmatpush1.msra.mxu0 0.0
        %468 = vmatprep.subr.mxu0 0.0
        %469 = vmatpush1.msra.mxu0 0.0
        %470 = vmatprep.subr.mxu0 0.0
        %471 = vmatpush1.msra.mxu0 0.0
        %472 = vmatprep.subr.mxu0 0.0
        %473 = vmatpush1.msra.mxu0 0.0
        %474 = vmatprep.subr.mxu0 0.0
        %475 = vmatpush1.msra.mxu0 0.0
        %476 = vmatprep.subr.mxu0 0.0
        %477 = vmatpush1.msra.mxu0 0.0
        %478 = vmatprep.subr.mxu0 0.0
        %479 = vmatpush1.msra.mxu0 0.0
        %480 = vmatprep.subr.mxu0 0.0
        %481 = vmatpush1.msra.mxu0 0.0
        %482 = vmatprep.subr.mxu0 0.0
        %483 = vmatpush1.msra.mxu0 0.0
        %484 = vmatprep.subr.mxu0 0.0
        %485 = vmatpush1.msra.mxu0 0.0
        %486 = vmatprep.subr.mxu0 0.0
        %487 = vmatpush1.msra.mxu0 0.0
        %488 = vmatprep.subr.mxu0 0.0
        %489 = vmatpush1.msra.mxu0 0.0
        %490 = vmatprep.subr.mxu0 0.0
        %491 = vmatpush1.msra.mxu0 0.0
        %492 = vmatprep.subr.mxu0 0.0
        %493 = vmatpush1.msra.mxu0 0.0
        %494 = vmatprep.subr.mxu0 0.0
        %495 = vmatpush1.msra.mxu0 0.0
        %496 = vmatprep.mubr.f32.mxu0 0.0
        %497 = vmatmul.mubr.f32.gmra.mrb[0].mxu0 %v217
        %v498 = vpop.f32.mrb[0].mxu0
        %v499 = vadd.f32 0.0, %v498
        %v500 = vpop.f32.mrb[0].mxu0
        %v501 = vadd.f32 0.0, %v500
        %502 = vdwg.mxu0
        %503 = vmatprep.subr.mxu0 %v175
        %504 = vmatpush1.msra.mxu0 %v174
        %505 = vmatprep.subr.mxu0 %v187
        %506 = vmatpush1.msra.mxu0 %v186
        %507 = vmatprep.subr.mxu0 %v199
        %508 = vmatpush1.msra.mxu0 %v198
        %509 = vmatprep.subr.mxu0 %v211
        %510 = vmatpush1.msra.mxu0 %v210
        %511 = vmatprep.subr.mxu0 0.0
        %512 = vmatpush1.msra.mxu0 0.0
        %513 = vmatprep.subr.mxu0 0.0
        %514 = vmatpush1.msra.mxu0 0.0
        %515 = vmatprep.subr.mxu0 0.0
        %516 = vmatpush1.msra.mxu0 0.0
        %517 = vmatprep.subr.mxu0 0.0
        %518 = vmatpush1.msra.mxu0 0.0
        %519 = vmatprep.subr.mxu0 0.0
        %520 = vmatpush1.msra.mxu0 0.0
        %521 = vmatprep.subr.mxu0 0.0
        %522 = vmatpush1.msra.mxu0 0.0
        %523 = vmatprep.subr.mxu0 0.0
        %524 = vmatpush1.msra.mxu0 0.0
        %525 = vmatprep.subr.mxu0 0.0
        %526 = vmatpush1.msra.mxu0 0.0
        %527 = vmatprep.subr.mxu0 0.0
        %528 = vmatpush1.msra.mxu0 0.0
        %529 = vmatprep.subr.mxu0 0.0
        %530 = vmatpush1.msra.mxu0 0.0
        %531 = vmatprep.subr.mxu0 0.0
        %532 = vmatpush1.msra.mxu0 0.0
        %533 = vmatprep.subr.mxu0 0.0
        %534 = vmatpush1.msra.mxu0 0.0
        %535 = vmatprep.subr.mxu0 0.0
        %536 = vmatpush1.msra.mxu0 0.0
        %537 = vmatprep.subr.mxu0 0.0
        %538 = vmatpush1.msra.mxu0 0.0
        %539 = vmatprep.subr.mxu0 0.0
        %540 = vmatpush1.msra.mxu0 0.0
        %541 = vmatprep.subr.mxu0 0.0
        %542 = vmatpush1.msra.mxu0 0.0
        %543 = vmatprep.subr.mxu0 0.0
        %544 = vmatpush1.msra.mxu0 0.0
        %545 = vmatprep.subr.mxu0 0.0
        %546 = vmatpush1.msra.mxu0 0.0
        %547 = vmatprep.subr.mxu0 0.0
        %548 = vmatpush1.msra.mxu0 0.0
        %549 = vmatprep.subr.mxu0 0.0
        %550 = vmatpush1.msra.mxu0 0.0
        %551 = vmatprep.subr.mxu0 0.0
        %552 = vmatpush1.msra.mxu0 0.0
        %553 = vmatprep.subr.mxu0 0.0
        %554 = vmatpush1.msra.mxu0 0.0
        %555 = vmatprep.subr.mxu0 0.0
        %556 = vmatpush1.msra.mxu0 0.0
        %557 = vmatprep.subr.mxu0 0.0
        %558 = vmatpush1.msra.mxu0 0.0
        %559 = vmatprep.subr.mxu0 0.0
        %560 = vmatpush1.msra.mxu0 0.0
        %561 = vmatprep.subr.mxu0 0.0
        %562 = vmatpush1.msra.mxu0 0.0
        %563 = vmatprep.subr.mxu0 0.0
        %564 = vmatpush1.msra.mxu0 0.0
        %565 = vmatprep.subr.mxu0 0.0
        %566 = vmatpush1.msra.mxu0 0.0
        %567 = vmatprep.mubr.f32.mxu0 0.0
        %568 = vmatmul.mubr.f32.gmra.mrb[0].mxu0 %v217
        %v569 = vpop.f32.mrb[0].mxu0
        %v570 = vadd.f32 0.0, %v569
        %v571 = vpop.f32.mrb[0].mxu0
        %v572 = vadd.f32 0.0, %v571
        %573 = vdwg.mxu0
        %574 = vmatprep.subr.mxu0 %v177
        %575 = vmatpush1.msra.mxu0 %v176
        %576 = vmatprep.subr.mxu0 %v189
        %577 = vmatpush1.msra.mxu0 %v188
        %578 = vmatprep.subr.mxu0 %v201
        %579 = vmatpush1.msra.mxu0 %v200
        %580 = vmatprep.subr.mxu0 %v213
        %581 = vmatpush1.msra.mxu0 %v212
        %582 = vmatprep.subr.mxu0 0.0
        %583 = vmatpush1.msra.mxu0 0.0
        %584 = vmatprep.subr.mxu0 0.0
        %585 = vmatpush1.msra.mxu0 0.0
        %586 = vmatprep.subr.mxu0 0.0
        %587 = vmatpush1.msra.mxu0 0.0
        %588 = vmatprep.subr.mxu0 0.0
        %589 = vmatpush1.msra.mxu0 0.0
        %590 = vmatprep.subr.mxu0 0.0
        %591 = vmatpush1.msra.mxu0 0.0
        %592 = vmatprep.subr.mxu0 0.0
        %593 = vmatpush1.msra.mxu0 0.0
        %594 = vmatprep.subr.mxu0 0.0
        %595 = vmatpush1.msra.mxu0 0.0
        %596 = vmatprep.subr.mxu0 0.0
        %597 = vmatpush1.msra.mxu0 0.0
        %598 = vmatprep.subr.mxu0 0.0
        %599 = vmatpush1.msra.mxu0 0.0
        %600 = vmatprep.subr.mxu0 0.0
        %601 = vmatpush1.msra.mxu0 0.0
        %602 = vmatprep.subr.mxu0 0.0
        %603 = vmatpush1.msra.mxu0 0.0
        %604 = vmatprep.subr.mxu0 0.0
        %605 = vmatpush1.msra.mxu0 0.0
        %606 = vmatprep.subr.mxu0 0.0
        %607 = vmatpush1.msra.mxu0 0.0
        %608 = vmatprep.subr.mxu0 0.0
        %609 = vmatpush1.msra.mxu0 0.0
        %610 = vmatprep.subr.mxu0 0.0
        %611 = vmatpush1.msra.mxu0 0.0
        %612 = vmatprep.subr.mxu0 0.0
        %613 = vmatpush1.msra.mxu0 0.0
        %614 = vmatprep.subr.mxu0 0.0
        %615 = vmatpush1.msra.mxu0 0.0
        %616 = vmatprep.subr.mxu0 0.0
        %617 = vmatpush1.msra.mxu0 0.0
        %618 = vmatprep.subr.mxu0 0.0
        %619 = vmatpush1.msra.mxu0 0.0
        %620 = vmatprep.subr.mxu0 0.0
        %621 = vmatpush1.msra.mxu0 0.0
        %622 = vmatprep.subr.mxu0 0.0
        %623 = vmatpush1.msra.mxu0 0.0
        %624 = vmatprep.subr.mxu0 0.0
        %625 = vmatpush1.msra.mxu0 0.0
        %626 = vmatprep.subr.mxu0 0.0
        %627 = vmatpush1.msra.mxu0 0.0
        %628 = vmatprep.subr.mxu0 0.0
        %629 = vmatpush1.msra.mxu0 0.0
        %630 = vmatprep.subr.mxu0 0.0
        %631 = vmatpush1.msra.mxu0 0.0
        %632 = vmatprep.subr.mxu0 0.0
        %633 = vmatpush1.msra.mxu0 0.0
        %634 = vmatprep.subr.mxu0 0.0
        %635 = vmatpush1.msra.mxu0 0.0
        %636 = vmatprep.subr.mxu0 0.0
        %637 = vmatpush1.msra.mxu0 0.0
        %638 = vmatprep.mubr.f32.mxu0 0.0
        %639 = vmatmul.mubr.f32.gmra.mrb[0].mxu0 %v217
        %v640 = vpop.f32.mrb[0].mxu0
        %v641 = vadd.f32 0.0, %v640
        %v642 = vpop.f32.mrb[0].mxu0
        %v643 = vadd.f32 0.0, %v642
        %644 = vdwg.mxu0
        %v645 = vxor.u32 %v499, 2147483648
        %v646 = vxor.u32 %v501, 2147483648
        %v647 = vxor.u32 %v570, 2147483648
        %v648 = vxor.u32 %v572, 2147483648
        %v649 = vxor.u32 %v641, 2147483648
        %v650 = vxor.u32 %v643, 2147483648
        %v651 = vmul.f32 %v645, 1.442695
        %v652 = vpow.pop %v651
        %v653 = vmul.f32 %v646, 1.442695
        %v654 = vpow.pop %v653
        %v655 = vmul.f32 %v647, 1.442695
        %v656 = vpow.pop %v655
        %v657 = vmul.f32 %v648, 1.442695
        %v658 = vpow.pop %v657
        %v659 = vmul.f32 %v649, 1.442695
        %v660 = vpow.pop %v659
        %v661 = vmul.f32 %v650, 1.442695
        %v662 = vpow.pop %v661
        %v663 = vadd.f32 %v652, 1.0
        %v664 = vadd.f32 %v654, 1.0
        %v665 = vadd.f32 %v656, 1.0
        %v666 = vadd.f32 %v658, 1.0
        %v667 = vadd.f32 %v660, 1.0
        %v668 = vadd.f32 %v662, 1.0
        %v669 = vrcp.pop %v663
        %v670 = vmul.f32 1.0, %v669
        %v671 = vrcp.pop %v664
        %v672 = vmul.f32 1.0, %v671
        %v673 = vrcp.pop %v665
        %v674 = vmul.f32 1.0, %v673
        %v675 = vrcp.pop %v666
        %v676 = vmul.f32 1.0, %v675
        %v677 = vrcp.pop %v667
        %v678 = vmul.f32 1.0, %v677
        %v679 = vrcp.pop %v668
        %v680 = vmul.f32 1.0, %v679
        %v681 = vmul.f32 %v499, %v670
        %v682 = vmul.f32 %v501, %v672
        %v683 = vmul.f32 %v570, %v674
        %v684 = vmul.f32 %v572, %v676
        %v685 = vmul.f32 %v641, %v678
        %v686 = vmul.f32 %v643, %v680
        %v687 = vmul.f32 %v681, %v286
        %v688 = vmul.f32 %v682, %v288
        %v689 = vmul.f32 %v683, %v357
        %v690 = vmul.f32 %v684, %v359
        %v691 = vmul.f32 %v685, %v428
        %v692 = vmul.f32 %v686, %v430
        %v693 = vld [vmem:[%s2] sm:$0xff]
        %v694 = vld [vmem:[%s2 + $0x8] sm:$0xff]
        %v695 = vld [vmem:[%s2 + $0x10] sm:$0xff]
        %v696 = vld [vmem:[%s2 + $0x18] sm:$0xff]
        %v697 = vld [vmem:[%s2 + $0x20] sm:$0xff]
        %v698 = vld [vmem:[%s2 + $0x28] sm:$0xff]
        %v699 = vld [vmem:[%s2 + $0x30] sm:$0xff]
        %v700 = vld [vmem:[%s2 + $0x38] sm:$0xff]
        %v701 = vld [vmem:[%s2 + $0x40] sm:$0xff]
        %v702 = vld [vmem:[%s2 + $0x48] sm:$0xff]
        %v703 = vld [vmem:[%s2 + $0x50] sm:$0xff]
        %v704 = vld [vmem:[%s2 + $0x58] sm:$0xff]
        %v705 = vld [vmem:[%s2 + $0x60] sm:$0xff]
        %v706 = vld [vmem:[%s2 + $0x68] sm:$0xff]
        %v707 = vld [vmem:[%s2 + $0x70] sm:$0xff]
        %v708 = vld [vmem:[%s2 + $0x78] sm:$0xff]
        %v709 = vld [vmem:[%s2 + $0x80] sm:$0xff]
        %v710 = vld [vmem:[%s2 + $0x88] sm:$0xff]
        %v711 = vld [vmem:[%s2 + $0x90] sm:$0xff]
        %v712 = vld [vmem:[%s2 + $0x98] sm:$0xff]
        %v713 = vld [vmem:[%s2 + $0xa0] sm:$0xff]
        %v714 = vld [vmem:[%s2 + $0xa8] sm:$0xff]
        %v715 = vld [vmem:[%s2 + $0xb0] sm:$0xff]
        %v716 = vld [vmem:[%s2 + $0xb8] sm:$0xff]
        %v717 = vld [vmem:[%s2 + $0xc0] sm:$0xff]
        %v718 = vld [vmem:[%s2 + $0xc8] sm:$0xff]
        %v719 = vld [vmem:[%s2 + $0xd0] sm:$0xff]
        %v720 = vld [vmem:[%s2 + $0xd8] sm:$0xff]
        %v721 = vld [vmem:[%s2 + $0xe0] sm:$0xff]
        %v722 = vld [vmem:[%s2 + $0xe8] sm:$0xff]
        %v723 = vld [vmem:[%s2 + $0xf0] sm:$0xff]
        %v724 = vld [vmem:[%s2 + $0xf8] sm:$0xff]
        %v725 = vld [vmem:[%s2 + $0x100] sm:$0xff]
        %v726 = vld [vmem:[%s2 + $0x108] sm:$0xff]
        %v727 = vld [vmem:[%s2 + $0x110] sm:$0xff]
        %v728 = vld [vmem:[%s2 + $0x118] sm:$0xff]
        %v729 = vld [vmem:[%s2 + $0x120] sm:$0xff]
        %v730 = vld [vmem:[%s2 + $0x128] sm:$0xff]
        %v731 = vld [vmem:[%s2 + $0x130] sm:$0xff]
        %v732 = vld [vmem:[%s2 + $0x138] sm:$0xff]
        %v733 = vld [vmem:[%s2 + $0x140] sm:$0xff]
        %v734 = vld [vmem:[%s2 + $0x148] sm:$0xff]
        %v735 = vld [vmem:[%s2 + $0x150] sm:$0xff]
        %v736 = vld [vmem:[%s2 + $0x158] sm:$0xff]
        %v737 = vld [vmem:[%s2 + $0x160] sm:$0xff]
        %v738 = vld [vmem:[%s2 + $0x168] sm:$0xff]
        %v739 = vld [vmem:[%s2 + $0x170] sm:$0xff]
        %v740 = vld [vmem:[%s2 + $0x178] sm:$0xff]
        %v741 = vld [vmem:[%s2 + $0x180] sm:$0xff]
        %v742 = vld [vmem:[%s2 + $0x188] sm:$0xff]
        %v743 = vld [vmem:[%s2 + $0x190] sm:$0xff]
        %v744 = vld [vmem:[%s2 + $0x198] sm:$0xff]
        %v745 = vld [vmem:[%s2 + $0x1a0] sm:$0xff]
        %v746 = vld [vmem:[%s2 + $0x1a8] sm:$0xff]
        %v747 = vld [vmem:[%s2 + $0x1b0] sm:$0xff]
        %v748 = vld [vmem:[%s2 + $0x1b8] sm:$0xff]
        %v749 = vld [vmem:[%s2 + $0x1c0] sm:$0xff]
        %v750 = vld [vmem:[%s2 + $0x1c8] sm:$0xff]
        %v751 = vld [vmem:[%s2 + $0x1d0] sm:$0xff]
        %v752 = vld [vmem:[%s2 + $0x1d8] sm:$0xff]
        %v753 = vld [vmem:[%s2 + $0x1e0] sm:$0xff]
        %v754 = vld [vmem:[%s2 + $0x1e8] sm:$0xff]
        %v755 = vld [vmem:[%s2 + $0x1f0] sm:$0xff]
        %v756 = vld [vmem:[%s2 + $0x1f8] sm:$0xff]
        %v757 = vld [vmem:[%s2 + $0x200] sm:$0xff]
        %v758 = vld [vmem:[%s2 + $0x208] sm:$0xff]
        %v759 = vld [vmem:[%s2 + $0x210] sm:$0xff]
        %v760 = vld [vmem:[%s2 + $0x218] sm:$0xff]
        %v761 = vld [vmem:[%s2 + $0x220] sm:$0xff]
        %v762 = vld [vmem:[%s2 + $0x228] sm:$0xff]
        %v763 = vld [vmem:[%s2 + $0x230] sm:$0xff]
        %v764 = vld [vmem:[%s2 + $0x238] sm:$0xff]
        %v765 = vld [vmem:[%s2 + $0x240] sm:$0xff]
        %v766 = vld [vmem:[%s2 + $0x248] sm:$0xff]
        %v767 = vld [vmem:[%s2 + $0x250] sm:$0xff]
        %v768 = vld [vmem:[%s2 + $0x258] sm:$0xff]
        %v769 = vld [vmem:[%s2 + $0x260] sm:$0xff]
        %v770 = vld [vmem:[%s2 + $0x268] sm:$0xff]
        %v771 = vld [vmem:[%s2 + $0x270] sm:$0xff]
        %v772 = vld [vmem:[%s2 + $0x278] sm:$0xff]
        %v773 = vld [vmem:[%s2 + $0x280] sm:$0xff]
        %v774 = vld [vmem:[%s2 + $0x288] sm:$0xff]
        %v775 = vld [vmem:[%s2 + $0x290] sm:$0xff]
        %v776 = vld [vmem:[%s2 + $0x298] sm:$0xff]
        %v777 = vld [vmem:[%s2 + $0x2a0] sm:$0xff]
        %v778 = vld [vmem:[%s2 + $0x2a8] sm:$0xff]
        %v779 = vld [vmem:[%s2 + $0x2b0] sm:$0xff]
        %v780 = vld [vmem:[%s2 + $0x2b8] sm:$0xff]
        %v781 = vld [vmem:[%s2 + $0x2c0] sm:$0xff]
        %v782 = vld [vmem:[%s2 + $0x2c8] sm:$0xff]
        %v783 = vld [vmem:[%s2 + $0x2d0] sm:$0xff]
        %v784 = vld [vmem:[%s2 + $0x2d8] sm:$0xff]
        %v785 = vld [vmem:[%s2 + $0x2e0] sm:$0xff]
        %v786 = vld [vmem:[%s2 + $0x2e8] sm:$0xff]
        %v787 = vld [vmem:[%s2 + $0x2f0] sm:$0xff]
        %v788 = vld [vmem:[%s2 + $0x2f8] sm:$0xff]
        %789 = vmatprep.subr.mxu0 0.0
        %790 = vmatpush1.msra.mxu0 %v693
        %791 = vmatprep.subr.mxu0 0.0
        %792 = vmatpush1.msra.mxu0 %v694
        %793 = vmatprep.subr.mxu0 0.0
        %794 = vmatpush1.msra.mxu0 %v695
        %795 = vmatprep.subr.mxu0 0.0
        %796 = vmatpush1.msra.mxu0 %v696
        %797 = vmatprep.subr.mxu0 0.0
        %798 = vmatpush1.msra.mxu0 %v697
        %799 = vmatprep.subr.mxu0 0.0
        %800 = vmatpush1.msra.mxu0 %v698
        %801 = vmatprep.subr.mxu0 0.0
        %802 = vmatpush1.msra.mxu0 %v699
        %803 = vmatprep.subr.mxu0 0.0
        %804 = vmatpush1.msra.mxu0 %v700
        %805 = vmatprep.subr.mxu0 0.0
        %806 = vmatpush1.msra.mxu0 %v701
        %807 = vmatprep.subr.mxu0 0.0
        %808 = vmatpush1.msra.mxu0 %v702
        %809 = vmatprep.subr.mxu0 0.0
        %810 = vmatpush1.msra.mxu0 %v703
        %811 = vmatprep.subr.mxu0 0.0
        %812 = vmatpush1.msra.mxu0 %v704
        %813 = vmatprep.subr.mxu0 0.0
        %814 = vmatpush1.msra.mxu0 %v705
        %815 = vmatprep.subr.mxu0 0.0
        %816 = vmatpush1.msra.mxu0 %v706
        %817 = vmatprep.subr.mxu0 0.0
        %818 = vmatpush1.msra.mxu0 %v707
        %819 = vmatprep.subr.mxu0 0.0
        %820 = vmatpush1.msra.mxu0 %v708
        %821 = vmatprep.subr.mxu0 0.0
        %822 = vmatpush1.msra.mxu0 %v709
        %823 = vmatprep.subr.mxu0 0.0
        %824 = vmatpush1.msra.mxu0 %v710
        %825 = vmatprep.subr.mxu0 0.0
        %826 = vmatpush1.msra.mxu0 %v711
        %827 = vmatprep.subr.mxu0 0.0
        %828 = vmatpush1.msra.mxu0 %v712
        %829 = vmatprep.subr.mxu0 0.0
        %830 = vmatpush1.msra.mxu0 %v713
        %831 = vmatprep.subr.mxu0 0.0
        %832 = vmatpush1.msra.mxu0 %v714
        %833 = vmatprep.subr.mxu0 0.0
        %834 = vmatpush1.msra.mxu0 %v715
        %835 = vmatprep.subr.mxu0 0.0
        %836 = vmatpush1.msra.mxu0 %v716
        %837 = vmatprep.subr.mxu0 0.0
        %838 = vmatpush1.msra.mxu0 %v717
        %839 = vmatprep.subr.mxu0 0.0
        %840 = vmatpush1.msra.mxu0 %v718
        %841 = vmatprep.subr.mxu0 0.0
        %842 = vmatpush1.msra.mxu0 %v719
        %843 = vmatprep.subr.mxu0 0.0
        %844 = vmatpush1.msra.mxu0 %v720
        %845 = vmatprep.subr.mxu0 0.0
        %846 = vmatpush1.msra.mxu0 %v721
        %847 = vmatprep.subr.mxu0 0.0
        %848 = vmatpush1.msra.mxu0 %v722
        %849 = vmatprep.subr.mxu0 0.0
        %850 = vmatpush1.msra.mxu0 %v723
        %851 = vmatprep.subr.mxu0 0.0
        %852 = vmatpush1.msra.mxu0 %v724
        %853 = vmatprep.mubr.f32.mxu0 %v688
        %854 = vmatmul.mubr.f32.gmra.mrb[0].mxu0 %v687
        %v855 = vpop.f32.mrb[0].mxu0
        %v856 = vadd.f32 0.0, %v855
        %v857 = vpop.f32.mrb[0].mxu0
        %858 = vdwg.mxu0
        %859 = vmatprep.subr.mxu0 0.0
        %860 = vmatpush1.msra.mxu0 %v725
        %861 = vmatprep.subr.mxu0 0.0
        %862 = vmatpush1.msra.mxu0 %v726
        %863 = vmatprep.subr.mxu0 0.0
        %864 = vmatpush1.msra.mxu0 %v727
        %865 = vmatprep.subr.mxu0 0.0
        %866 = vmatpush1.msra.mxu0 %v728
        %867 = vmatprep.subr.mxu0 0.0
        %868 = vmatpush1.msra.mxu0 %v729
        %869 = vmatprep.subr.mxu0 0.0
        %870 = vmatpush1.msra.mxu0 %v730
        %871 = vmatprep.subr.mxu0 0.0
        %872 = vmatpush1.msra.mxu0 %v731
        %873 = vmatprep.subr.mxu0 0.0
        %874 = vmatpush1.msra.mxu0 %v732
        %875 = vmatprep.subr.mxu0 0.0
        %876 = vmatpush1.msra.mxu0 %v733
        %877 = vmatprep.subr.mxu0 0.0
        %878 = vmatpush1.msra.mxu0 %v734
        %879 = vmatprep.subr.mxu0 0.0
        %880 = vmatpush1.msra.mxu0 %v735
        %881 = vmatprep.subr.mxu0 0.0
        %882 = vmatpush1.msra.mxu0 %v736
        %883 = vmatprep.subr.mxu0 0.0
        %884 = vmatpush1.msra.mxu0 %v737
        %885 = vmatprep.subr.mxu0 0.0
        %886 = vmatpush1.msra.mxu0 %v738
        %887 = vmatprep.subr.mxu0 0.0
        %888 = vmatpush1.msra.mxu0 %v739
        %889 = vmatprep.subr.mxu0 0.0
        %890 = vmatpush1.msra.mxu0 %v740
        %891 = vmatprep.subr.mxu0 0.0
        %892 = vmatpush1.msra.mxu0 %v741
        %893 = vmatprep.subr.mxu0 0.0
        %894 = vmatpush1.msra.mxu0 %v742
        %895 = vmatprep.subr.mxu0 0.0
        %896 = vmatpush1.msra.mxu0 %v743
        %897 = vmatprep.subr.mxu0 0.0
        %898 = vmatpush1.msra.mxu0 %v744
        %899 = vmatprep.subr.mxu0 0.0
        %900 = vmatpush1.msra.mxu0 %v745
        %901 = vmatprep.subr.mxu0 0.0
        %902 = vmatpush1.msra.mxu0 %v746
        %903 = vmatprep.subr.mxu0 0.0
        %904 = vmatpush1.msra.mxu0 %v747
        %905 = vmatprep.subr.mxu0 0.0
        %906 = vmatpush1.msra.mxu0 %v748
        %907 = vmatprep.subr.mxu0 0.0
        %908 = vmatpush1.msra.mxu0 %v749
        %909 = vmatprep.subr.mxu0 0.0
        %910 = vmatpush1.msra.mxu0 %v750
        %911 = vmatprep.subr.mxu0 0.0
        %912 = vmatpush1.msra.mxu0 %v751
        %913 = vmatprep.subr.mxu0 0.0
        %914 = vmatpush1.msra.mxu0 %v752
        %915 = vmatprep.subr.mxu0 0.0
        %916 = vmatpush1.msra.mxu0 %v753
        %917 = vmatprep.subr.mxu0 0.0
        %918 = vmatpush1.msra.mxu0 %v754
        %919 = vmatprep.subr.mxu0 0.0
        %920 = vmatpush1.msra.mxu0 %v755
        %921 = vmatprep.subr.mxu0 0.0
        %922 = vmatpush1.msra.mxu0 %v756
        %923 = vmatprep.mubr.f32.mxu0 %v690
        %924 = vmatmul.mubr.f32.gmra.mrb[0].mxu0 %v689
        %v925 = vpop.f32.mrb[0].mxu0
        %v926 = vadd.f32 %v856, %v925
        %v927 = vpop.f32.mrb[0].mxu0
        %928 = vdwg.mxu0
        %929 = vmatprep.subr.mxu0 0.0
        %930 = vmatpush1.msra.mxu0 %v757
        %931 = vmatprep.subr.mxu0 0.0
        %932 = vmatpush1.msra.mxu0 %v758
        %933 = vmatprep.subr.mxu0 0.0
        %934 = vmatpush1.msra.mxu0 %v759
        %935 = vmatprep.subr.mxu0 0.0
        %936 = vmatpush1.msra.mxu0 %v760
        %937 = vmatprep.subr.mxu0 0.0
        %938 = vmatpush1.msra.mxu0 %v761
        %939 = vmatprep.subr.mxu0 0.0
        %940 = vmatpush1.msra.mxu0 %v762
        %941 = vmatprep.subr.mxu0 0.0
        %942 = vmatpush1.msra.mxu0 %v763
        %943 = vmatprep.subr.mxu0 0.0
        %944 = vmatpush1.msra.mxu0 %v764
        %945 = vmatprep.subr.mxu0 0.0
        %946 = vmatpush1.msra.mxu0 %v765
        %947 = vmatprep.subr.mxu0 0.0
        %948 = vmatpush1.msra.mxu0 %v766
        %949 = vmatprep.subr.mxu0 0.0
        %950 = vmatpush1.msra.mxu0 %v767
        %951 = vmatprep.subr.mxu0 0.0
        %952 = vmatpush1.msra.mxu0 %v768
        %953 = vmatprep.subr.mxu0 0.0
        %954 = vmatpush1.msra.mxu0 %v769
        %955 = vmatprep.subr.mxu0 0.0
        %956 = vmatpush1.msra.mxu0 %v770
        %957 = vmatprep.subr.mxu0 0.0
        %958 = vmatpush1.msra.mxu0 %v771
        %959 = vmatprep.subr.mxu0 0.0
        %960 = vmatpush1.msra.mxu0 %v772
        %961 = vmatprep.subr.mxu0 0.0
        %962 = vmatpush1.msra.mxu0 %v773
        %963 = vmatprep.subr.mxu0 0.0
        %964 = vmatpush1.msra.mxu0 %v774
        %965 = vmatprep.subr.mxu0 0.0
        %966 = vmatpush1.msra.mxu0 %v775
        %967 = vmatprep.subr.mxu0 0.0
        %968 = vmatpush1.msra.mxu0 %v776
        %969 = vmatprep.subr.mxu0 0.0
        %970 = vmatpush1.msra.mxu0 %v777
        %971 = vmatprep.subr.mxu0 0.0
        %972 = vmatpush1.msra.mxu0 %v778
        %973 = vmatprep.subr.mxu0 0.0
        %974 = vmatpush1.msra.mxu0 %v779
        %975 = vmatprep.subr.mxu0 0.0
        %976 = vmatpush1.msra.mxu0 %v780
        %977 = vmatprep.subr.mxu0 0.0
        %978 = vmatpush1.msra.mxu0 %v781
        %979 = vmatprep.subr.mxu0 0.0
        %980 = vmatpush1.msra.mxu0 %v782
        %981 = vmatprep.subr.mxu0 0.0
        %982 = vmatpush1.msra.mxu0 %v783
        %983 = vmatprep.subr.mxu0 0.0
        %984 = vmatpush1.msra.mxu0 %v784
        %985 = vmatprep.subr.mxu0 0.0
        %986 = vmatpush1.msra.mxu0 %v785
        %987 = vmatprep.subr.mxu0 0.0
        %988 = vmatpush1.msra.mxu0 %v786
        %989 = vmatprep.subr.mxu0 0.0
        %990 = vmatpush1.msra.mxu0 %v787
        %991 = vmatprep.subr.mxu0 0.0
        %992 = vmatpush1.msra.mxu0 %v788
        %993 = vmatprep.mubr.f32.mxu0 %v692
        %994 = vmatmul.mubr.f32.gmra.mrb[0].mxu0 %v691
        %v995 = vpop.f32.mrb[0].mxu0
        %v996 = vadd.f32 %v926, %v995
        %v997 = vpop.f32.mrb[0].mxu0
        %998 = vdwg.mxu0
        %999 = vst.msk [vmem:[%s161] sm:$0xff] %vm215, %v996
        %s1000 = sand.u32 %s93, 1
        %s1001 = scalar_lea.sflag [#allocation3], %s1000
        %s1002 = sand.u32 %s93, 1
        %s1003 = smul.addr %s1002, 8
        %s1004 = scalar_lea.vmem [#allocation2], %s1003
        // Predicated region
        $region33: #{swiglu_mlp.1} parent=31 // pred_check
          %p1005 = pneg %p103
        $region34: #{swiglu_mlp.1} parent=31 // pred_check_branch
          %1007 = sbr.rel (%p1005) target = $region36
        $region35: #{swiglu_mlp.1} parent=31 // pred_region
          %s1009 = ssub.s32 128, 128
          %1010 = vsyncadd %s1001, %s1009
          %s1011 = smul.addr %s17, 128
          %s1012 = scalar_lea.hbm %s3, %s1011
          %s1014 = sshll.u32 %s1004, 4
          %s1015 = int_to_ptr.vmem [resolvable:$true] %s1014
          %1017 = dma.vmem_to_hbm [thread:$0]  %s1015, 128, %s1012, %s1001
        $region36: #{swiglu_mlp.1} parent=31 // pred_fallthru
          _
      $region32: #{swiglu_mlp.1} parent=5 // pred_fallthru
        _
      %p1018 = scmp.le.s32.totalorder 2, %s12
      // Predicated region
      $region37: #{swiglu_mlp.1} parent=5 // pred_check
        %p1019 = pneg %p1018
      $region38: #{swiglu_mlp.1} parent=5 // pred_check_branch
        %1021 = sbr.rel (%p1019) target = $region40
      $region39: #{swiglu_mlp.1} parent=5 // pred_region
        %s1022 = ssub.s32 %s12, 2
        // Predicated region
        $region41: #{swiglu_mlp.1} parent=39 // pred_check
          %p1023 = pneg %p109
        $region42: #{swiglu_mlp.1} parent=39 // pred_check_branch
          %1025 = sbr.rel (%p1023) target = $region44
        $region43: #{swiglu_mlp.1} parent=39 // pred_region
          %s1026 = sand.u32 %s94, 1
          %s1027 = scalar_lea.sflag [#allocation3], %s1026
          %s1028 = sand.u32 %s94, 1
          %s1029 = smul.addr %s1028, 8
          %s1030 = scalar_lea.vmem [#allocation2], %s1029
          %1031 = dma.done %s1027, 128
        $region44: #{swiglu_mlp.1} parent=39 // pred_fallthru
          _
      $region40: #{swiglu_mlp.1} parent=5 // pred_fallthru
        _
    $region6: #{swiglu_mlp.1} parent=1 // loop_footer
      %s16 = sadd.s32 1, %s12
    $region7: #{swiglu_mlp.1} parent=1 // loop_footer_branch
      %11 = sbr.rel target = $region3
    $region8: #{swiglu_mlp.1} parent=1 // loop_exit
      _
    %1032 = vsyncpa [#allocation3], 1
    %s1033 = scalar_lea.sflag [#allocation3], 1
    %1034 = vsyncpa %s1033, 1

</llo_original>
